<compile_context>
chip_gen: v7x
topology: tpu7x:2x2x1
jax: 0.10.0
libtpu: 0.0.40
codegen_flags: <defaults>
</compile_context>

<pallas_src>
import functools

import jax
import jax.numpy as jnp
from jax import lax
from jax.experimental import pallas as pl
from jax.experimental.pallas import tpu as pltpu

SMOOTHING = 0.1


def _ls_loss_kernel(logits_ref, labels_ref, partial_ref, *, n_total, smoothing):
    i = pl.program_id(0)

    x = logits_ref[...]                                   # [tile_n, C] native dtype
    labels = labels_ref[...]                              # [tile_n, 1] int32
    tn, c = x.shape

    # Log-softmax statistics.  max / sum / label-pick stay on the raw dtype
    # (f32-accumulated reductions); only exp(x - m) is computed in f32.
    m = jnp.max(x, axis=-1, keepdims=True).astype(jnp.float32)        # [tn, 1]
    sum_x = jnp.sum(x, axis=-1, keepdims=True, dtype=jnp.float32)     # [tn, 1]

    class_ids = lax.broadcasted_iota(jnp.int32, (tn, c), 1)
    x_label = jnp.sum(jnp.where(class_ids == labels, x, jnp.zeros_like(x)),
                      axis=-1, keepdims=True, dtype=jnp.float32)      # [tn, 1]

    z = x.astype(jnp.float32) - m                                     # [tn, C]
    lse = m + jnp.log(jnp.sum(jnp.exp(z), axis=-1, keepdims=True))    # [tn, 1]

    # per_row = -( (1-s)*(x_label - lse) + (s/C)*(sum_x - C*lse) )
    #         =  lse - (1-s)*x_label - (s/C)*sum_x
    per_row = lse - (1.0 - smoothing) * x_label - (smoothing / c) * sum_x

    # Mask rows past the true batch size in the (possibly ragged) last tile.
    # Use where (not multiply) so unspecified data cannot inject NaN.
    row_ids = i * tn + lax.broadcasted_iota(jnp.int32, (tn, 1), 0)
    tile_sum = jnp.sum(jnp.where(row_ids < n_total, per_row, 0.0))

    partial_ref[...] = jnp.broadcast_to(tile_sum.reshape(1, 1, 1),
                                        partial_ref.shape)


def _vmem_capacity_bytes():
    try:
        return int(pltpu.get_tpu_info().vmem_capacity_bytes)
    except Exception:
        return 64 * 1024 * 1024  # conservative fallback (v7x per-TC VMEM)


def label_smoothing_loss(logits, labels, *, smoothing=SMOOTHING):
    """logits: [N, C] float32/bfloat16, labels: [N] int class ids -> scalar loss.

    Reproduces LabelSmoothingLoss(smoothing, reduction='mean',
    apply_logsoftmax=True, ignore_index=-1) for integer class labels
    (the default forward path of the PyTorch module).
    """
    n, c = logits.shape
    labels2d = labels.astype(jnp.int32).reshape(n, 1)

    sub = 16 if logits.dtype == jnp.bfloat16 else 8
    itemsize = jnp.dtype(logits.dtype).itemsize

    # Generation-aware tile/VMEM budget: bigger tiles where 128 MiB VMEM is
    # available (v5e/v6e), conservative on v7x (64 MiB per TC) where the f32
    # upcast/exp temporaries roughly quadruple the working set.
    if _vmem_capacity_bytes() >= 128 * 1024 * 1024:
        target_buf_bytes = 8 << 20      # 16 MiB double-buffered logits
        limit_cap = 96 << 20
    else:
        target_buf_bytes = 4 << 20      # 8 MiB double-buffered logits
        limit_cap = 48 << 20

    rows_for_target = max(sub, target_buf_bytes // (c * itemsize))
    n_rounded = pl.cdiv(n, sub) * sub
    tile_n = min(rows_for_target, n_rounded)
    tile_n = max(sub, (tile_n // sub) * sub)
    num_tiles = pl.cdiv(n, tile_n)

    # Explicit scoped-VMEM limit: double-buffered logits + labels + headroom
    # for the f32 intermediates (upcast, exp, iota/where temporaries).
    f32_tile_bytes = tile_n * c * 4
    est_bytes = (2 * tile_n * c * itemsize      # logits double buffer
                 + 2 * tile_n * 4               # labels double buffer
                 + 4 * f32_tile_bytes           # f32 temporaries headroom
                 + (2 << 20))                   # slack
    vmem_limit = int(min(max(est_bytes, 16 << 20), limit_cap))

    kernel = functools.partial(_ls_loss_kernel, n_total=n, smoothing=smoothing)

    partials = pl.pallas_call(
        kernel,
        out_shape=jax.ShapeDtypeStruct((num_tiles, 8, 128), jnp.float32),
        grid_spec=pltpu.PrefetchScalarGridSpec(
            num_scalar_prefetch=0,
            grid=(num_tiles,),
            in_specs=[
                pl.BlockSpec((tile_n, c), lambda i: (i, 0)),   # logits tile
                pl.BlockSpec((tile_n, 1), lambda i: (i, 0)),   # labels tile
            ],
            out_specs=pl.BlockSpec((1, 8, 128), lambda i: (i, 0, 0)),
        ),
        compiler_params=pltpu.CompilerParams(
            dimension_semantics=("parallel",),   # no cross-tile carry -> 2-TC split on v7x
            vmem_limit_bytes=vmem_limit),
    )(logits, labels2d)

    # Tiny final reduction over per-tile partial sums; mean over the true N.
    return jnp.sum(partials[:, 0, 0]) / jnp.float32(n)


# TODO(synk): the ignore_index != -1 branches of the PyTorch module (row
# filtering by label != ignore_index and the label==2 sentinel / dense-label
# path) involve data-dependent row selection and are not implemented; only the
# default forward path (integer labels, ignore_index=-1) is reproduced.


def _reference(logits, labels, smoothing):
    onehot = jax.nn.one_hot(labels, logits.shape[-1], dtype=jnp.float32)
    sm = onehot * (1.0 - smoothing) + smoothing / logits.shape[-1]
    sm = sm / sm.sum(-1, keepdims=True)
    logs = jax.nn.log_softmax(logits.astype(jnp.float32), axis=-1)
    return jnp.mean(-jnp.sum(logs * sm, axis=-1))


if __name__ == "__main__":
    key = jax.random.PRNGKey(0)

    # Case 1: tile-divisible batch.
    k1, k2 = jax.random.split(key)
    N, C = 8, 32
    logits = jax.random.normal(k1, (N, C), dtype=jnp.float32)
    labels = jax.random.randint(k2, (N,), 0, C, dtype=jnp.int32)
    loss = label_smoothing_loss(logits, labels)
    jax.block_until_ready(loss)
    ref = _reference(logits, labels, SMOOTHING)
    assert jnp.allclose(loss, ref, atol=1e-5, rtol=1e-5), (loss, ref)

    # Case 2: ragged batch (exercises the in-kernel row mask, no jnp.pad).
    k3, k4 = jax.random.split(k2)
    N2, C2 = 13, 32
    logits2 = jax.random.normal(k3, (N2, C2), dtype=jnp.float32)
    labels2 = jax.random.randint(k4, (N2,), 0, C2, dtype=jnp.int32)
    loss2 = label_smoothing_loss(logits2, labels2)
    jax.block_until_ready(loss2)
    ref2 = _reference(logits2, labels2, SMOOTHING)
    assert jnp.allclose(loss2, ref2, atol=1e-5, rtol=1e-5), (loss2, ref2)

    print("KERNEL_OK")
</pallas_src>

<mosaic_0001>
module attributes {stable_mosaic.version = 11 : i64} {
  func.func @_ls_loss_kernel(%arg0: i32, %arg1: memref<8x32xf32, #tpu.memory_space<vmem>>, %arg2: memref<8x1xi32, #tpu.memory_space<vmem>>, %arg3: memref<1x8x128xf32, #tpu.memory_space<vmem>>) attributes {dimension_semantics = [#tpu.dimension_semantics<parallel>], iteration_bounds = array<i64: 1>, scalar_prefetch = 0 : i64, scratch_operands = 0 : i64, tpu.core_type = #tpu.core_type<tc>, window_params = [{transform_indices = @transform_0, window_bounds = array<i64: 8, 32>}, {transform_indices = @transform_1, window_bounds = array<i64: 8, 1>}, {transform_indices = @transform_2, window_bounds = array<i64: 1, 8, 128>}]} {
    %c0 = arith.constant 0 : index
    %c0_0 = arith.constant 0 : index
    %0 = vector.load %arg1[%c0, %c0_0] : memref<8x32xf32, #tpu.memory_space<vmem>>, vector<8x32xf32>
    %c0_1 = arith.constant 0 : index
    %c0_2 = arith.constant 0 : index
    %1 = vector.load %arg2[%c0_1, %c0_2] : memref<8x1xi32, #tpu.memory_space<vmem>>, vector<8x1xi32>
    %cst = arith.constant dense<0xFF800000> : vector<8xf32>
    %2 = vector.multi_reduction <maximumf>, %0, %cst [1] : vector<8x32xf32> to vector<8xf32>
    %3 = vector.shape_cast %2 : vector<8xf32> to vector<8x1xf32>
    %cst_3 = arith.constant dense<0.000000e+00> : vector<8xf32>
    %4 = vector.multi_reduction <add>, %0, %cst_3 [1] : vector<8x32xf32> to vector<8xf32>
    %5 = vector.shape_cast %4 : vector<8xf32> to vector<8x1xf32>
    %6 = tpu.iota {dimensions = array<i32: 1>} : vector<8x32xi32>
    %7 = vector.broadcast %1 : vector<8x1xi32> to vector<8x32xi32>
    %8 = arith.cmpi eq, %6, %7 : vector<8x32xi32>
    %cst_4 = arith.constant 0.000000e+00 : f32
    %9 = vector.broadcast %cst_4 : f32 to vector<8x32xf32>
    %10 = arith.select %8, %0, %9 : vector<8x32xi1>, vector<8x32xf32>
    %cst_5 = arith.constant dense<0.000000e+00> : vector<8xf32>
    %11 = vector.multi_reduction <add>, %10, %cst_5 [1] : vector<8x32xf32> to vector<8xf32>
    %12 = vector.shape_cast %11 : vector<8xf32> to vector<8x1xf32>
    %13 = vector.broadcast %3 : vector<8x1xf32> to vector<8x32xf32>
    %14 = arith.subf %0, %13 : vector<8x32xf32>
    %15 = math.exp %14 : vector<8x32xf32>
    %cst_6 = arith.constant dense<0.000000e+00> : vector<8xf32>
    %16 = vector.multi_reduction <add>, %15, %cst_6 [1] : vector<8x32xf32> to vector<8xf32>
    %17 = vector.shape_cast %16 : vector<8xf32> to vector<8x1xf32>
    %18 = math.log %17 : vector<8x1xf32>
    %19 = arith.addf %3, %18 : vector<8x1xf32>
    %cst_7 = arith.constant 0.899999976 : f32
    %20 = vector.broadcast %cst_7 : f32 to vector<8x1xf32>
    %21 = arith.mulf %20, %12 : vector<8x1xf32>
    %22 = arith.subf %19, %21 : vector<8x1xf32>
    %cst_8 = arith.constant 3.125000e-03 : f32
    %23 = vector.broadcast %cst_8 : f32 to vector<8x1xf32>
    %24 = arith.mulf %23, %5 : vector<8x1xf32>
    %25 = arith.subf %22, %24 : vector<8x1xf32>
    %c8_i32 = arith.constant 8 : i32
    %26 = arith.muli %arg0, %c8_i32 : i32
    %27 = tpu.iota {dimensions = array<i32: 0>} : vector<8x1xi32>
    %28 = vector.broadcast %26 : i32 to vector<8x1xi32>
    %29 = arith.addi %28, %27 : vector<8x1xi32>
    %c8_i32_9 = arith.constant 8 : i32
    %30 = vector.broadcast %c8_i32_9 : i32 to vector<8x1xi32>
    %31 = arith.cmpi slt, %29, %30 : vector<8x1xi32>
    %cst_10 = arith.constant 0.000000e+00 : f32
    %32 = vector.broadcast %cst_10 : f32 to vector<8x1xf32>
    %33 = arith.select %31, %25, %32 : vector<8x1xi1>, vector<8x1xf32>
    %34 = vector.shape_cast %33 : vector<8x1xf32> to vector<1x8x1xf32>
    %cst_11 = arith.constant dense<0.000000e+00> : vector<1xf32>
    %35 = vector.multi_reduction <add>, %34, %cst_11 [1, 2] : vector<1x8x1xf32> to vector<1xf32>
    %36 = vector.shape_cast %35 : vector<1xf32> to vector<1x1x1xf32>
    %37 = vector.extract %36[0, 0, 0] : f32 from vector<1x1x1xf32>
    %38 = vector.broadcast %37 : f32 to vector<1x1x1xf32>
    %39 = vector.shape_cast %38 : vector<1x1x1xf32> to vector<1x1x1xf32>
    %40 = vector.broadcast %39 : vector<1x1x1xf32> to vector<1x8x128xf32>
    %c0_12 = arith.constant 0 : index
    %c0_13 = arith.constant 0 : index
    %c0_14 = arith.constant 0 : index
    %41 = vector.load %arg3[%c0_12, %c0_13, %c0_14] : memref<1x8x128xf32, #tpu.memory_space<vmem>>, vector<1x8x128xf32>
    tpu.vector_store %arg3[%c0_12, %c0_13, %c0_14], %40 {strides = array<i32>} : memref<1x8x128xf32, #tpu.memory_space<vmem>>, vector<1x8x128xf32>,
    return
  }
  func.func @transform_0(%arg0: i32) -> (i32, i32) {
    %c0_i32 = arith.constant 0 : i32
    %c0_i32_0 = arith.constant 0 : i32
    return %arg0, %c0_i32 : i32, i32
  }
  func.func @transform_1(%arg0: i32) -> (i32, i32) {
    %c0_i32 = arith.constant 0 : i32
    %c0_i32_0 = arith.constant 0 : i32
    return %arg0, %c0_i32 : i32, i32
  }
  func.func @transform_2(%arg0: i32) -> (i32, i32, i32) {
    %c0_i32 = arith.constant 0 : i32
    %c0_i32_0 = arith.constant 0 : i32
    %c0_i32_1 = arith.constant 0 : i32
    return %arg0, %c0_i32, %c0_i32_0 : i32, i32, i32
  }
}

</mosaic_0001>

<llo_original>
// kernel: tpu_custom_call.1
$region0: #{tpu_custom_call.1}
  #allocation0 [shape = 'u32[]', space=smem, size = 0x4, offset = 0x4, fixed_abs, tag = 'smem constant byte address 0x4 - core index']
  #allocation1 [shape = 'u32[144,128]{1,0:T(1,128)}', space=vmem, size = 0x12000, scoped, tag = 'internal scratch']
  %s0 = inlined_call_operand.vmem [shape: f32[8,32], index: 0, kind: input, shape index: {}]
  %s1 = inlined_call_operand.vmem [shape: s32[8,1], index: 1, kind: input, shape index: {}]
  %s2 = inlined_call_operand.hbm [shape: f32[1,8,128], index: 2, kind: output, shape index: {}]
  %s3 = sld [smem:[#allocation0]]
  $region18: #{tpu_custom_call.1} parent=0
    _
  %s5 = ssub.s32 1, %s3
  %s6 = scalar_select 0, %s5, %s3
  $region1: #{tpu_custom_call.1} parent=0
    #allocation2 [shape = 'u8[4096]{0}', space=vmem, size = 0x1000, scoped, tag = 'output window, operand 0, single buffered']
    #allocation3 [shape = 's32[1]{0}', space=sflag, size = 0x4, scoped, tag = 'scoped memory for tpu_custom_call.1']
    %7 = vsyncpa [#allocation3], 0
    // Predicated region
    $region2: #{tpu_custom_call.1} parent=1 // pred_check
      _
    $region3: #{tpu_custom_call.1} parent=1 // pred_check_branch
      %9 = sbr.rel (0) target = $region5
    $region4: #{tpu_custom_call.1} parent=1 // pred_region
      _
    $region5: #{tpu_custom_call.1} parent=1 // pred_fallthru
      _
    // Predicated region
    $region6: #{tpu_custom_call.1} parent=1 // pred_check
      _
    $region7: #{tpu_custom_call.1} parent=1 // pred_check_branch
      %11 = sbr.rel (0) target = $region9
    $region8: #{tpu_custom_call.1} parent=1 // pred_region
      _
    $region9: #{tpu_custom_call.1} parent=1 // pred_fallthru
      _
    %v12 = vld [vmem:[%s0] sm:$0xff]
    %v13 = vld [vmem:[%s1] sm:$0xff]
    %vm14 = vcmask 261120
    %v15 = vsel %vm14, %v12, -inf
    %16 = vmax.xlane.f32.xlu0 %v15
    %v17 = vpop.xlane.xlu0 %16
    %v18 = vsel %vm14, %v12, 0.0
    %19 = vadd.xlane.f32.xlu0 %v18
    %v20 = vpop.xlane.xlu0 %19
    %v21 = vlaneseq
    %v22 = vand.u32 %v21, 127
    %23 = vset.pattern.permute.xlu0 0
    %24 = vperm.xlu0 %23, %v13
    %v25 = vpop.permute.xlu0 %24
    %vm26 = vcmp.eq.s32.totalorder %v22, %v25
    %v27 = vsel %vm26, %v12, 0.0
    %v28 = vsel %vm14, %v27, 0.0
    %29 = vadd.xlane.f32.xlu0 %v28
    %v30 = vpop.xlane.xlu0 %29
    %v31 = vsub.f32 %v12, %v17
    %v32 = vmul.f32 %v31, 1.442695
    %v33 = vpow.pop %v32
    %v34 = vsel %vm14, %v33, 0.0
    %35 = vadd.xlane.f32.xlu0 %v34
    %v36 = vpop.xlane.xlu0 %35
    %v37 = vlog2.pop %v36
    %v38 = vmul.f32 %v37, 0.6931472
    %v39 = vadd.f32 %v17, %v38
    %v40 = vmul.f32 %v30, 0.9
    %v41 = vsub.f32 %v39, %v40
    %v42 = vmul.f32 %v20, 0.003125
    %v43 = vsub.f32 %v41, %v42
    %s44 = smul.u32 0, 8
    %v45 = vlaneseq
    %v46 = vshrl.u32 %v45, 7
    %v47 = vstv %s44
    %v48 = vadd.s32 %v47, %v46
    %vm49 = vcmp.lt.s32.totalorder %v48, 8
    %v50 = vsel %vm49, %v43, 0.0
    %vm51 = vcmask 7168
    %v52 = vsel %vm51, %v50, 0.0
    %53 = vadd.xlane.f32.xlu0 %v52
    %v54 = vpop.xlane.xlu0 %53
    %v55 = vrot.slane %v54, 4
    %v56 = vadd.f32 %v54, %v55
    %v57 = vrot.slane %v56, 2
    %v58 = vadd.f32 %v56, %v57
    %v59 = vrot.slane %v58, 1
    %v60 = vadd.f32 %v58, %v59
    %s61 = vtos %v60
    %v62 = vstv %s61
    %63 = vst [vmem:[#allocation2] sm:$0xff] %v62
    // Predicated region
    $region10: #{tpu_custom_call.1} parent=1 // pred_check
      _
    $region11: #{tpu_custom_call.1} parent=1 // pred_check_branch
      %65 = sbr.rel (0) target = $region13
    $region12: #{tpu_custom_call.1} parent=1 // pred_region
      %s67 = ssub.s32 128, 128
      %68 = vsyncadd [#allocation3], %s67
      %s70 = sshll.u32 [#allocation2], 4
      %s71 = int_to_ptr.vmem [resolvable:$true] %s70
      %73 = dma.vmem_to_hbm [thread:$0]  %s71, 128, %s2, [#allocation3]
    $region13: #{tpu_custom_call.1} parent=1 // pred_fallthru
      _
    // Predicated region
    $region14: #{tpu_custom_call.1} parent=1 // pred_check
      _
    $region15: #{tpu_custom_call.1} parent=1 // pred_check_branch
      %75 = sbr.rel (0) target = $region17
    $region16: #{tpu_custom_call.1} parent=1 // pred_region
      %76 = dma.done [#allocation3], 128
    $region17: #{tpu_custom_call.1} parent=1 // pred_fallthru
      _
    %77 = vsyncpa [#allocation3], 1

</llo_original>
